<compile_context>
chip_gen: v6e
topology: v6e:2x2x1
jax: 0.10.0
libtpu: 0.0.40
codegen_flags: <defaults>
</compile_context>

<pallas_src>
import jax
import jax.numpy as jnp
from jax.experimental import pallas as pl
from jax.experimental.pallas import tpu as pltpu


_LANE = 128
_SUBLANE = 8
_BN_EPS = 1e-5
_V_CHUNK = 1024          # vocab chunk size for the one-hot MXU gather


def _round_up(x, m):
    return ((x + m - 1) // m) * m


def _vmem_limit_bytes():
    """Per-generation VMEM limit: physical capacity minus compiler headroom."""
    phys = 64 << 20                       # conservative fallback (v7x physical)
    try:
        phys = int(pltpu.get_tpu_info().vmem_capacity_bytes)
    except Exception:
        pass
    return int(max(phys - (12 << 20), 32 << 20))


def _padded_bytes(rows, cols, itemsize=4):
    """(8,128)-tile-padded VMEM footprint of a 2-D f32/int32 block."""
    return (_round_up(max(rows, 1), _SUBLANE)
            * _round_up(max(cols, 1), _LANE) * itemsize)


# ---------------------------------------------------------------------------
# Kernel 1: full-batch BatchNorm statistics -> per-feature scale / shift
# ---------------------------------------------------------------------------
def _make_bn_stats_kernel(batch, tile_b, eps):
    """Accumulates sum/sumsq over batch tiles; finalizes scale/shift."""

    def kernel(num_ref, gamma_ref, beta_ref, stats_ref):
        i = pl.program_id(0)

        @pl.when(i == 0)
        def _():
            stats_ref[...] = jnp.zeros_like(stats_ref)

        x = num_ref[...].astype(jnp.float32)                       # [TB, F]
        row = jax.lax.broadcasted_iota(jnp.int32, x.shape, 0) + i * tile_b
        x = jnp.where(row < batch, x, 0.0)                         # mask pad rows
        stats_ref[0:1, :] += jnp.sum(x, axis=0, keepdims=True)
        stats_ref[1:2, :] += jnp.sum(x * x, axis=0, keepdims=True)

        @pl.when(i == pl.num_programs(0) - 1)
        def _():
            inv_n = 1.0 / float(batch)
            mean = stats_ref[0:1, :] * inv_n
            var = jnp.maximum(stats_ref[1:2, :] * inv_n - mean * mean, 0.0)
            scale = gamma_ref[...] * jax.lax.rsqrt(var + eps)
            stats_ref[0:1, :] = scale                              # row 0: scale
            stats_ref[1:2, :] = beta_ref[...] - mean * scale       # row 1: shift

    return kernel


# ---------------------------------------------------------------------------
# Kernel 2: fused one-hot MXU gather + affine BN + concat, one dense store
# ---------------------------------------------------------------------------
def _make_fused_kernel(table_specs, num_dim, tile_b, total_dim_pad):
    """table_specs: tuple of (true_vocab, padded_vocab, emb_dim)."""
    n_tables = len(table_specs)
    total_dim = sum(d for _, _, d in table_specs) + num_dim
    pad_cols = total_dim_pad - total_dim

    def kernel(*refs):
        pos = 0
        if n_tables:
            cat_ref = refs[pos]
            pos += 1
        if num_dim:
            num_ref, stats_ref = refs[pos], refs[pos + 1]
            pos += 2
        table_refs = refs[pos:pos + n_tables]
        out_ref = refs[pos + n_tables]

        parts = []

        # --- Embedding gathers: one-hot rows on the MXU (exact 0/1 weights,
        #     f32 accumulation), chunked along the vocab axis. ---
        for t, (vocab, vocab_pad, _dim) in enumerate(table_specs):
            idx = jnp.clip(cat_ref[:, t:t + 1], 0, vocab - 1)      # [TB, 1]
            acc = None
            for v0 in range(0, vocab_pad, _V_CHUNK):
                vc = min(_V_CHUNK, vocab_pad - v0)
                lanes = jax.lax.broadcasted_iota(jnp.int32, (tile_b, vc), 1) + v0
                one_hot = (lanes == idx).astype(jnp.float32)       # [TB, vc]
                part = jnp.dot(one_hot, table_refs[t][v0:v0 + vc, :],
                               preferred_element_type=jnp.float32,
                               precision=jax.lax.Precision.HIGHEST)
                acc = part if acc is None else acc + part
            parts.append(acc)                                      # [TB, D_t]

        # --- BatchNorm1d (training mode): precomputed full-batch scale/shift.
        if num_dim:
            x = num_ref[...].astype(jnp.float32)
            parts.append(x * stats_ref[0:1, :] + stats_ref[1:2, :])

        # Pad to a full 128-lane slab so the store / HBM writeback is dense.
        if pad_cols:
            parts.append(jnp.zeros((tile_b, pad_cols), jnp.float32))

        out_ref[...] = (jnp.concatenate(parts, axis=1)
                        if len(parts) > 1 else parts[0])           # ONE store

    return kernel


# ---------------------------------------------------------------------------
# Wrapper
# ---------------------------------------------------------------------------
def embedding_layer_forward(categorical_inputs, tables, numerical=None,
                            gamma=None, beta=None, *, eps=_BN_EPS):
    n_tables = len(tables)
    num_dim = 0 if numerical is None else int(numerical.shape[1])
    if n_tables == 0 and num_dim == 0:
        b = 0 if categorical_inputs is None else int(categorical_inputs.shape[0])
        return jnp.zeros((b, 0), jnp.float32)

    batch = (int(categorical_inputs.shape[0]) if n_tables
             else int(numerical.shape[0]))
    table_shapes = tuple((int(t.shape[0]), int(t.shape[1])) for t in tables)
    total_dim = sum(d for _, d in table_shapes) + num_dim
    total_dim_pad = _round_up(total_dim, _LANE)

    # Batch tiling: parallel grid axis (megacore / v7x 2-TC split + pipelining).
    tile_b = 256 if batch >= 256 else _round_up(max(batch, 1), _SUBLANE)
    batch_pad = _round_up(batch, tile_b)
    n_bt = batch_pad // tile_b

    vmem_limit = _vmem_limit_bytes()

    # (8,128)-padded residency check for the VMEM-resident tables.
    table_specs = tuple((v, _round_up(v, _SUBLANE), d) for v, d in table_shapes)
    resident = sum(_padded_bytes(vp, d) for _, vp, d in table_specs)
    per_step = 2 * (_padded_bytes(tile_b, max(n_tables, 1))
                    + _padded_bytes(tile_b, max(num_dim, 1))
                    + _padded_bytes(tile_b, total_dim_pad))
    per_step += _padded_bytes(2, max(num_dim, 1))
    if resident + per_step > vmem_limit:
        # TODO(synk): chunked HBM gather (memory_space=pl.ANY table + scalar-
        # prefetch-driven pltpu.make_async_copy row DMA) for tables whose
        # padded footprint exceeds VMEM (e.g. 100k-row vocabs on v7x).
        raise NotImplementedError(
            f"Embedding tables need ~{resident + per_step} B of VMEM "
            f"(limit {vmem_limit} B); chunked HBM gather path not implemented.")

    # ---- Stage 1: full-batch BatchNorm statistics (training mode) ----------
    stats = None
    num_pad = None
    if num_dim:
        num_pad = jnp.pad(numerical.astype(jnp.float32),
                          ((0, batch_pad - batch), (0, 0)))
        g = jnp.asarray(gamma, jnp.float32).reshape(1, num_dim)
        b_ = jnp.asarray(beta, jnp.float32).reshape(1, num_dim)
        stats = pl.pallas_call(
            _make_bn_stats_kernel(batch, tile_b, eps),
            out_shape=jax.ShapeDtypeStruct((2, num_dim), jnp.float32),
            grid=(n_bt,),
            in_specs=[pl.BlockSpec((tile_b, num_dim), lambda i: (i, 0)),
                      pl.BlockSpec((1, num_dim), lambda i: (0, 0)),
                      pl.BlockSpec((1, num_dim), lambda i: (0, 0))],
            out_specs=pl.BlockSpec((2, num_dim), lambda i: (0, 0)),
            compiler_params=pltpu.CompilerParams(
                dimension_semantics=("arbitrary",),
                vmem_limit_bytes=vmem_limit),
        )(num_pad, g, b_)

    # ---- Stage 2: fused gather + normalize + concat, tiled over batch -------
    in_specs = []
    args = []
    if n_tables:
        cat_pad = jnp.pad(categorical_inputs.astype(jnp.int32),
                          ((0, batch_pad - batch), (0, 0)))
        in_specs.append(pl.BlockSpec((tile_b, n_tables), lambda i: (i, 0)))
        args.append(cat_pad)
    if num_dim:
        in_specs.append(pl.BlockSpec((tile_b, num_dim), lambda i: (i, 0)))
        args.append(num_pad)
        in_specs.append(pl.BlockSpec((2, num_dim), lambda i: (0, 0)))
        args.append(stats)
    for (v, vp, d), tab in zip(table_specs, tables):
        # Vocab rows padded to a sublane multiple; whole table VMEM-resident,
        # grid-invariant block (fetched once).
        tab_p = jnp.pad(tab.astype(jnp.float32), ((0, vp - v), (0, 0)))
        in_specs.append(pl.BlockSpec((vp, d), lambda i: (0, 0)))
        args.append(tab_p)

    out = pl.pallas_call(
        _make_fused_kernel(table_specs, num_dim, tile_b, total_dim_pad),
        out_shape=jax.ShapeDtypeStruct((batch_pad, total_dim_pad), jnp.float32),
        grid=(n_bt,),
        in_specs=in_specs,
        out_specs=pl.BlockSpec((tile_b, total_dim_pad), lambda i: (i, 0)),
        compiler_params=pltpu.CompilerParams(
            dimension_semantics=("parallel",),
            vmem_limit_bytes=vmem_limit),
    )(*args)

    return out[:batch, :total_dim]


# ---------------------------------------------------------------------------
# Module-equivalent wrapper
# ---------------------------------------------------------------------------
class EmbeddingLayer:
    """JAX/Pallas port of the PyTorch EmbeddingLayer forward pass."""

    def __init__(self, categorical_dims, embedding_dims, numerical_dim, key):
        self.categorical_dims = list(categorical_dims)
        self.embedding_dims = list(embedding_dims)
        self.numerical_dim = int(numerical_dim)

        # nn.Embedding default init: N(0, 1), f32 for exact parity.
        self.tables = []
        for cat_dim, emb_dim in zip(self.categorical_dims, self.embedding_dims):
            key, sub = jax.random.split(key)
            vocab = min(int(cat_dim), 100000)
            self.tables.append(
                jax.random.normal(sub, (vocab, int(emb_dim)), dtype=jnp.float32))

        if self.numerical_dim > 0:
            # nn.BatchNorm1d defaults: gamma = 1, beta = 0 (training mode).
            # TODO(synk): running_mean / running_var buffers are not tracked;
            # parity is forward-output-only (training-mode batch statistics).
            self.gamma = jnp.ones((self.numerical_dim,), jnp.float32)
            self.beta = jnp.zeros((self.numerical_dim,), jnp.float32)
        else:
            self.gamma = None
            self.beta = None

        total_params = sum(t.shape[0] * t.shape[1] for t in self.tables)
        print(f"Created {len(self.tables)} embedding layers")
        print(f"Total embedding parameters: {total_params:,}")

    def __call__(self, categorical_inputs, numerical_inputs):
        if not self.tables and self.numerical_dim == 0:
            return jnp.zeros((categorical_inputs.shape[0], 0), jnp.float32)
        return embedding_layer_forward(
            categorical_inputs,
            self.tables,
            numerical_inputs if self.numerical_dim > 0 else None,
            self.gamma,
            self.beta)


# ---------------------------------------------------------------------------
# Pure-JAX reference (silent correctness check)
# ---------------------------------------------------------------------------
def _reference_forward(layer, categorical_inputs, numerical_inputs):
    feats = []
    for i, table in enumerate(layer.tables):
        v = table.shape[0]
        idx = jnp.clip(categorical_inputs[:, i].astype(jnp.int32), 0, v - 1)
        feats.append(jnp.take(table, idx, axis=0))
    if layer.numerical_dim > 0:
        x = numerical_inputs.astype(jnp.float32)
        mean = jnp.mean(x, axis=0, keepdims=True)
        var = jnp.mean((x - mean) ** 2, axis=0, keepdims=True)
        feats.append((x - mean) * jax.lax.rsqrt(var + _BN_EPS) * layer.gamma
                     + layer.beta)
    return jnp.concatenate(feats, axis=1)


if __name__ == "__main__":
    key = jax.random.PRNGKey(0)
    k_param, k_cat, k_num = jax.random.split(key, 3)

    # Small synthetic problem consistent with the module.
    categorical_dims = [50, 30, 1000]
    embedding_dims = [8, 4, 16]
    numerical_dim = 6
    batch = 8

    layer = EmbeddingLayer(categorical_dims, embedding_dims, numerical_dim,
                           k_param)

    # Indices intentionally exceed some vocab sizes to exercise the clamp.
    categorical_inputs = jax.random.randint(
        k_cat, (batch, len(categorical_dims)), 0, 1200, dtype=jnp.int32)
    numerical_inputs = jax.random.normal(
        k_num, (batch, numerical_dim), dtype=jnp.float32)

    out = layer(categorical_inputs, numerical_inputs)
    out = jax.block_until_ready(out)

    expected_dim = sum(embedding_dims) + numerical_dim
    assert out.shape == (batch, expected_dim), out.shape

    ref = _reference_forward(layer, categorical_inputs, numerical_inputs)
    max_err = float(jnp.max(jnp.abs(out - ref)))
    assert max_err < 1e-4, max_err

    print("KERNEL_OK")
</pallas_src>

<mosaic_0001>
module attributes {stable_mosaic.version = 11 : i64} {
  func.func @kernel(%arg0: i32, %arg1: memref<8x6xf32, #tpu.memory_space<vmem>>, %arg2: memref<1x6xf32, #tpu.memory_space<vmem>>, %arg3: memref<1x6xf32, #tpu.memory_space<vmem>>, %arg4: memref<2x6xf32, #tpu.memory_space<vmem>>) attributes {dimension_semantics = [#tpu.dimension_semantics<arbitrary>], iteration_bounds = array<i64: 1>, scalar_prefetch = 0 : i64, scratch_operands = 0 : i64, tpu.core_type = #tpu.core_type<tc>, window_params = [{transform_indices = @transform_0, window_bounds = array<i64: 8, 6>}, {pipeline_mode = #tpu.pipeline_mode<synchronous>, transform_indices = @transform_1, window_bounds = array<i64: 1, 6>}, {pipeline_mode = #tpu.pipeline_mode<synchronous>, transform_indices = @transform_2, window_bounds = array<i64: 1, 6>}, {pipeline_mode = #tpu.pipeline_mode<synchronous>, transform_indices = @transform_3, window_bounds = array<i64: 2, 6>}]} {
    %c0_i32 = arith.constant 0 : i32
    %0 = arith.cmpi eq, %arg0, %c0_i32 : i32
    %1 = arith.extui %0 : i1 to i32
    %c0_i32_0 = arith.constant 0 : i32
    %2 = arith.cmpi ne, %1, %c0_i32_0 : i32
    scf.if %2 {
      %cst_14 = arith.constant 0.000000e+00 : f32
      %26 = vector.broadcast %cst_14 : f32 to vector<2x6xf32>
      %c0_15 = arith.constant 0 : index
      %c0_16 = arith.constant 0 : index
      %27 = vector.load %arg4[%c0_15, %c0_16] : memref<2x6xf32, #tpu.memory_space<vmem>>, vector<2x6xf32>
      tpu.vector_store %arg4[%c0_15, %c0_16], %26 {strides = array<i32>} : memref<2x6xf32, #tpu.memory_space<vmem>>, vector<2x6xf32>,
    } else {
    }
    %c0 = arith.constant 0 : index
    %c0_1 = arith.constant 0 : index
    %3 = vector.load %arg1[%c0, %c0_1] : memref<8x6xf32, #tpu.memory_space<vmem>>, vector<8x6xf32>
    %4 = tpu.iota {dimensions = array<i32: 0>} : vector<8x6xi32>
    %c8_i32 = arith.constant 8 : i32
    %5 = arith.muli %arg0, %c8_i32 : i32
    %6 = vector.broadcast %5 : i32 to vector<8x6xi32>
    %7 = arith.addi %4, %6 : vector<8x6xi32>
    %c8_i32_2 = arith.constant 8 : i32
    %8 = vector.broadcast %c8_i32_2 : i32 to vector<8x6xi32>
    %9 = arith.cmpi slt, %7, %8 : vector<8x6xi32>
    %cst = arith.constant 0.000000e+00 : f32
    %10 = vector.broadcast %cst : f32 to vector<8x6xf32>
    %11 = arith.select %9, %3, %10 : vector<8x6xi1>, vector<8x6xf32>
    %c0_3 = arith.constant 0 : index
    %c0_4 = arith.constant 0 : index
    %12 = vector.load %arg4[%c0_3, %c0_4] : memref<2x6xf32, #tpu.memory_space<vmem>>, vector<1x6xf32>
    %cst_5 = arith.constant dense<0.000000e+00> : vector<6xf32>
    %13 = vector.multi_reduction <add>, %11, %cst_5 [0] : vector<8x6xf32> to vector<6xf32>
    %14 = vector.shape_cast %13 : vector<6xf32> to vector<1x6xf32>
    %15 = arith.addf %12, %14 : vector<1x6xf32>
    %c0_6 = arith.constant 0 : index
    %c0_7 = arith.constant 0 : index
    %16 = vector.load %arg4[%c0_6, %c0_7] : memref<2x6xf32, #tpu.memory_space<vmem>>, vector<1x6xf32>
    tpu.vector_store %arg4[%c0_6, %c0_7], %15 {strides = array<i32>} : memref<2x6xf32, #tpu.memory_space<vmem>>, vector<1x6xf32>,
    %c1 = arith.constant 1 : index
    %c0_8 = arith.constant 0 : index
    %17 = vector.load %arg4[%c1, %c0_8] : memref<2x6xf32, #tpu.memory_space<vmem>>, vector<1x6xf32>
    %18 = arith.mulf %11, %11 : vector<8x6xf32>
    %cst_9 = arith.constant dense<0.000000e+00> : vector<6xf32>
    %19 = vector.multi_reduction <add>, %18, %cst_9 [0] : vector<8x6xf32> to vector<6xf32>
    %20 = vector.shape_cast %19 : vector<6xf32> to vector<1x6xf32>
    %21 = arith.addf %17, %20 : vector<1x6xf32>
    %c1_10 = arith.constant 1 : index
    %c0_11 = arith.constant 0 : index
    %22 = vector.load %arg4[%c1_10, %c0_11] : memref<2x6xf32, #tpu.memory_space<vmem>>, vector<1x6xf32>
    tpu.vector_store %arg4[%c1_10, %c0_11], %21 {strides = array<i32>} : memref<2x6xf32, #tpu.memory_space<vmem>>, vector<1x6xf32>,
    %c0_i32_12 = arith.constant 0 : i32
    %23 = arith.cmpi eq, %arg0, %c0_i32_12 : i32
    %24 = arith.extui %23 : i1 to i32
    %c0_i32_13 = arith.constant 0 : i32
    %25 = arith.cmpi ne, %24, %c0_i32_13 : i32
    scf.if %25 {
      %c0_14 = arith.constant 0 : index
      %c0_15 = arith.constant 0 : index
      %26 = vector.load %arg4[%c0_14, %c0_15] : memref<2x6xf32, #tpu.memory_space<vmem>>, vector<1x6xf32>
      %cst_16 = arith.constant 1.250000e-01 : f32
      %27 = vector.broadcast %cst_16 : f32 to vector<1x6xf32>
      %28 = arith.mulf %26, %27 : vector<1x6xf32>
      %c1_17 = arith.constant 1 : index
      %c0_18 = arith.constant 0 : index
      %29 = vector.load %arg4[%c1_17, %c0_18] : memref<2x6xf32, #tpu.memory_space<vmem>>, vector<1x6xf32>
      %cst_19 = arith.constant 1.250000e-01 : f32
      %30 = vector.broadcast %cst_19 : f32 to vector<1x6xf32>
      %31 = arith.mulf %29, %30 : vector<1x6xf32>
      %32 = arith.mulf %28, %28 : vector<1x6xf32>
      %33 = arith.subf %31, %32 : vector<1x6xf32>
      %cst_20 = arith.constant 0.000000e+00 : f32
      %34 = vector.broadcast %cst_20 : f32 to vector<1x6xf32>
      %35 = arith.maximumf %33, %34 : vector<1x6xf32>
      %c0_21 = arith.constant 0 : index
      %c0_22 = arith.constant 0 : index
      %36 = vector.load %arg2[%c0_21, %c0_22] : memref<1x6xf32, #tpu.memory_space<vmem>>, vector<1x6xf32>
      %cst_23 = arith.constant 9.99999974E-6 : f32
      %37 = vector.broadcast %cst_23 : f32 to vector<1x6xf32>
      %38 = arith.addf %35, %37 : vector<1x6xf32>
      %39 = math.rsqrt %38 : vector<1x6xf32>
      %40 = arith.mulf %36, %39 : vector<1x6xf32>
      %c0_24 = arith.constant 0 : index
      %c0_25 = arith.constant 0 : index
      %41 = vector.load %arg4[%c0_24, %c0_25] : memref<2x6xf32, #tpu.memory_space<vmem>>, vector<1x6xf32>
      tpu.vector_store %arg4[%c0_24, %c0_25], %40 {strides = array<i32>} : memref<2x6xf32, #tpu.memory_space<vmem>>, vector<1x6xf32>,
      %c0_26 = arith.constant 0 : index
      %c0_27 = arith.constant 0 : index
      %42 = vector.load %arg3[%c0_26, %c0_27] : memref<1x6xf32, #tpu.memory_space<vmem>>, vector<1x6xf32>
      %43 = arith.mulf %28, %40 : vector<1x6xf32>
      %44 = arith.subf %42, %43 : vector<1x6xf32>
      %c1_28 = arith.constant 1 : index
      %c0_29 = arith.constant 0 : index
      %45 = vector.load %arg4[%c1_28, %c0_29] : memref<2x6xf32, #tpu.memory_space<vmem>>, vector<1x6xf32>
      tpu.vector_store %arg4[%c1_28, %c0_29], %44 {strides = array<i32>} : memref<2x6xf32, #tpu.memory_space<vmem>>, vector<1x6xf32>,
    } else {
    }
    return
  }
  func.func @transform_0(%arg0: i32) -> (i32, i32) {
    %c0_i32 = arith.constant 0 : i32
    %c0_i32_0 = arith.constant 0 : i32
    return %arg0, %c0_i32 : i32, i32
  }
  func.func @transform_1(%arg0: i32) -> (i32, i32) {
    %c0_i32 = arith.constant 0 : i32
    %c0_i32_0 = arith.constant 0 : i32
    %c0_i32_1 = arith.constant 0 : i32
    return %c0_i32, %c0_i32_0 : i32, i32
  }
  func.func @transform_2(%arg0: i32) -> (i32, i32) {
    %c0_i32 = arith.constant 0 : i32
    %c0_i32_0 = arith.constant 0 : i32
    %c0_i32_1 = arith.constant 0 : i32
    return %c0_i32, %c0_i32_0 : i32, i32
  }
  func.func @transform_3(%arg0: i32) -> (i32, i32) {
    %c0_i32 = arith.constant 0 : i32
    %c0_i32_0 = arith.constant 0 : i32
    %c0_i32_1 = arith.constant 0 : i32
    return %c0_i32, %c0_i32_0 : i32, i32
  }
}

</mosaic_0001>

<llo_original>
// kernel: tpu_custom_call.1
$region0: #{tpu_custom_call.1}
  #allocation0 [shape = 'u32[]', space=smem, size = 0x4, offset = 0x4, fixed_abs, tag = 'smem constant byte address 0x4 - core index']
  #allocation1 [shape = 'u32[144,128]{1,0:T(1,128)}', space=vmem, size = 0x12000, scoped, tag = 'internal scratch']
  %s0 = inlined_call_operand.hbm [shape: f32[8,6], index: 0, kind: input, shape index: {}]
  %s1 = inlined_call_operand.vmem [shape: f32[1,6], index: 1, kind: input, shape index: {}]
  %s2 = inlined_call_operand.vmem [shape: f32[1,6], index: 2, kind: input, shape index: {}]
  %s3 = inlined_call_operand.hbm [shape: f32[2,6], index: 3, kind: output, shape index: {}]
  %s4 = sld [smem:[#allocation0]]
  $region34: #{tpu_custom_call.1} parent=0
    _
  %s6 = ssub.s32 1, %s4
  %s7 = scalar_select 0, %s6, %s4
  $region1: #{tpu_custom_call.1} parent=0
    #allocation2 [shape = 'u8[4096]{0}', space=vmem, size = 0x1000, scoped, tag = 'input window, operand 0, single buffered']
    #allocation3 [shape = 's32[1]{0}', space=sflag, size = 0x4, scoped, tag = 'scoped memory for tpu_custom_call.1']
    #allocation4 [shape = 's32[1]{0}', space=sflag, size = 0x4, scoped, tag = 'scoped memory for tpu_custom_call.1']
    #allocation5 [shape = 'u8[1024]{0}', space=vmem, size = 0x400, scoped, tag = 'output window, operand 0, single buffered']
    %8 = vsyncpa [#allocation3], 0
    %9 = vsyncpa [#allocation4], 0
    // Predicated region
    $region2: #{tpu_custom_call.1} parent=1 // pred_check
      _
    $region3: #{tpu_custom_call.1} parent=1 // pred_check_branch
      %11 = sbr.rel (0) target = $region5
    $region4: #{tpu_custom_call.1} parent=1 // pred_region
      %s13 = ssub.s32 128, 128
      %14 = vsyncadd [#allocation3], %s13
      %s16 = sshll.u32 [#allocation2], 4
      %s17 = int_to_ptr.vmem [resolvable:$true] %s16
      %19 = dma.hbm_to_vmem [thread:$0]  %s0, 128, %s17, [#allocation3]
    $region5: #{tpu_custom_call.1} parent=1 // pred_fallthru
      _
    // Predicated region
    $region6: #{tpu_custom_call.1} parent=1 // pred_check
      _
    $region7: #{tpu_custom_call.1} parent=1 // pred_check_branch
      %21 = sbr.rel (0) target = $region9
    $region8: #{tpu_custom_call.1} parent=1 // pred_region
      _
    $region9: #{tpu_custom_call.1} parent=1 // pred_fallthru
      _
    // Predicated region
    $region10: #{tpu_custom_call.1} parent=1 // pred_check
      _
    $region11: #{tpu_custom_call.1} parent=1 // pred_check_branch
      %23 = sbr.rel (0) target = $region13
    $region12: #{tpu_custom_call.1} parent=1 // pred_region
      _
    $region13: #{tpu_custom_call.1} parent=1 // pred_fallthru
      _
    // Predicated region
    $region14: #{tpu_custom_call.1} parent=1 // pred_check
      _
    $region15: #{tpu_custom_call.1} parent=1 // pred_check_branch
      %25 = sbr.rel (0) target = $region17
    $region16: #{tpu_custom_call.1} parent=1 // pred_region
      %26 = dma.done [#allocation3], 128
    $region17: #{tpu_custom_call.1} parent=1 // pred_fallthru
      _
    %p27 = scmp.eq.s32.totalorder 0, 0
    // Predicated region
    $region18: #{tpu_custom_call.1} parent=1 // pred_check
      %p28 = pneg %p27
    $region19: #{tpu_custom_call.1} parent=1 // pred_check_branch
      %30 = sbr.rel (%p28) target = $region21
    $region20: #{tpu_custom_call.1} parent=1 // pred_region
      %vm31 = vcmask 41984
      %32 = vst.msk [vmem:[#allocation5] sm:$0x3] %vm31, 0.0
    $region21: #{tpu_custom_call.1} parent=1 // pred_fallthru
      _
    %v33 = vld [vmem:[#allocation2] sm:$0xff]
    %v34 = vlaneseq
    %v35 = vshrl.u32 %v34, 7
    %s36 = smul.u32 0, 8
    %v37 = vstv %s36
    %v38 = vadd.s32 %v35, %v37
    %vm39 = vcmp.lt.s32.totalorder %v38, 8
    %v40 = vsel %vm39, %v33, 0.0
    %v41 = vld [vmem:[#allocation5] sm:$0x1]
    %vm42 = vcmask 48128
    %v43 = vsel %vm42, %v40, 0.0
    %v44 = vrot.slane %v43, 4
    %v45 = vadd.f32 %v43, %v44
    %v46 = vrot.slane %v45, 2
    %v47 = vadd.f32 %v45, %v46
    %v48 = vrot.slane %v47, 1
    %v49 = vadd.f32 %v47, %v48
    %v50 = vadd.f32 %v41, %v49
    %vm51 = vcmask 40960
    %52 = vst.msk [vmem:[#allocation5] sm:$0x1] %vm51, %v50
    %v53 = vld [vmem:[#allocation5 + $0x1] sm:$0x1]
    %v54 = vmul.f32 %v40, %v40
    %v55 = vsel %vm42, %v54, 0.0
    %v56 = vrot.slane %v55, 4
    %v57 = vadd.f32 %v55, %v56
    %v58 = vrot.slane %v57, 2
    %v59 = vadd.f32 %v57, %v58
    %v60 = vrot.slane %v59, 1
    %v61 = vadd.f32 %v59, %v60
    %v62 = vadd.f32 %v53, %v61
    %63 = vst.msk [vmem:[#allocation5 + $0x1] sm:$0x1] %vm51, %v62
    // Predicated region
    $region22: #{tpu_custom_call.1} parent=1 // pred_check
      %p64 = pneg %p27
    $region23: #{tpu_custom_call.1} parent=1 // pred_check_branch
      %66 = sbr.rel (%p64) target = $region25
    $region24: #{tpu_custom_call.1} parent=1 // pred_region
      %v67 = vld [vmem:[#allocation5] sm:$0x1]
      %v68 = vmul.f32 %v67, 0.125
      %v69 = vld [vmem:[#allocation5 + $0x1] sm:$0x1]
      %v70 = vmul.f32 %v69, 0.125
      %v71 = vmul.f32 %v68, %v68
      %v72 = vsub.f32 %v70, %v71
      %v73 = vmax.f32 %v72, 0.0
      %v74 = vld [vmem:[%s1] sm:$0x1]
      %v75 = vadd.f32 %v73, 1e-05
      %v76 = vrsqrt.pop %v75
      %v77 = vmul.f32 %v74, %v76
      %78 = vst.msk [vmem:[#allocation5] sm:$0x1] %vm51, %v77
      %v79 = vld [vmem:[%s2] sm:$0x1]
      %v80 = vmul.f32 %v68, %v77
      %v81 = vsub.f32 %v79, %v80
      %82 = vst.msk [vmem:[#allocation5 + $0x1] sm:$0x1] %vm51, %v81
    $region25: #{tpu_custom_call.1} parent=1 // pred_fallthru
      _
    // Predicated region
    $region26: #{tpu_custom_call.1} parent=1 // pred_check
      _
    $region27: #{tpu_custom_call.1} parent=1 // pred_check_branch
      %84 = sbr.rel (0) target = $region29
    $region28: #{tpu_custom_call.1} parent=1 // pred_region
      %s86 = ssub.s32 32, 32
      %87 = vsyncadd [#allocation4], %s86
      %s89 = sshll.u32 [#allocation5], 4
      %s90 = int_to_ptr.vmem [resolvable:$true] %s89
      %92 = dma.vmem_to_hbm [thread:$0]  %s90, 32, %s3, [#allocation4]
    $region29: #{tpu_custom_call.1} parent=1 // pred_fallthru
      _
    // Predicated region
    $region30: #{tpu_custom_call.1} parent=1 // pred_check
      _
    $region31: #{tpu_custom_call.1} parent=1 // pred_check_branch
      %94 = sbr.rel (0) target = $region33
    $region32: #{tpu_custom_call.1} parent=1 // pred_region
      %95 = dma.done [#allocation4], 32
    $region33: #{tpu_custom_call.1} parent=1 // pred_fallthru
      _
    %96 = vsyncpa [#allocation3], 1
    %97 = vsyncpa [#allocation4], 1

</llo_original>
